<compile_context>
chip_gen: v5e
topology: v5e:2x2
jax: 0.10.0
libtpu: 0.0.40
codegen_flags: <defaults>
</compile_context>

<pallas_src>
import functools

import jax
import jax.numpy as jnp
from jax.experimental import pallas as pl
from jax.experimental.pallas import tpu as pltpu


def _round_up(x, m):
    return ((x + m - 1) // m) * m


def _vmem_caps():
    """Returns (tile_budget_bytes, vmem_limit_cap_bytes), generation-aware."""
    try:
        info = pltpu.get_tpu_info()
        phys = int(getattr(info, "vmem_capacity_bytes", 64 << 20))
    except Exception:
        phys = 64 << 20                      # assume the smallest (v7x-like)
    if phys <= (64 << 20):                   # v7x: 64 MiB physical per TC
        return 36 << 20, 48 << 20
    return 64 << 20, 96 << 20                # v5e / v6e: 128 MiB physical


def _vmem_per_row(c_pad, itemsize):
    """Estimated VMEM bytes per logits row, counting lane padding."""
    logits = 2 * c_pad * itemsize            # double-buffered logits tile
    targets = 2 * 128 * 4                    # (tile_n, 1) int32 lane-pads to 128
    temps = 4 * c_pad * 4                    # f32 upcast / exp / mask temporaries
    return logits + targets + temps


def _choose_tile_n(c_pad, itemsize, budget):
    t = budget // max(1, _vmem_per_row(c_pad, itemsize))
    t = max(8, (t // 8) * 8)
    return int(min(t, 1 << 16))              # sanity cap on per-step vector work


def _focal_values(logits, tgt, *, alpha, gamma):
    """Per-row focal loss for one (TN, C) tile.  Returns (TN, 1) float32."""
    x = logits.astype(jnp.float32)                          # upcast in-vreg
    tgt = tgt.astype(jnp.int32)                             # (TN, 1)

    # cross_entropy(reduction='none') = logsumexp(x) - x[target]
    m = jnp.max(x, axis=-1, keepdims=True)                  # (TN, 1)
    lse = m + jnp.log(jnp.sum(jnp.exp(x - m), axis=-1, keepdims=True))
    col = jax.lax.broadcasted_iota(jnp.int32, x.shape, 1)   # (TN, C)
    tgt_logit = jnp.sum(jnp.where(col == tgt, x, 0.0), axis=-1, keepdims=True)
    ce = jnp.maximum(lse - tgt_logit, 0.0)                  # clamp rounding noise

    pt = jnp.exp(-ce)
    base = jnp.maximum(1.0 - pt, 0.0)
    if float(gamma).is_integer() and 0 <= int(gamma) <= 8:
        w = jnp.ones_like(base)
        for _ in range(int(gamma)):                         # VPU multiplies, no EUP pow
            w = w * base
    else:
        w = base ** jnp.float32(gamma)
    return jnp.float32(alpha) * w * ce                      # (TN, 1)


def _focal_mean_kernel(x_ref, t_ref, psum_ref, *, alpha, gamma, n_valid, tile_n):
    i = pl.program_id(0)
    focal = _focal_values(x_ref[...], t_ref[...], alpha=alpha, gamma=gamma)
    # Mask rows past N (ragged boundary block: the tail rows hold garbage).
    row = jax.lax.broadcasted_iota(jnp.int32, (tile_n, 1), 0) + i * tile_n
    focal = jnp.where(row < n_valid, focal, 0.0)
    psum_ref[0, 0] = jnp.sum(focal)                         # per-tile partial sum


def _focal_rows_kernel(x_ref, t_ref, o_ref, *, alpha, gamma):
    o_ref[...] = _focal_values(x_ref[...], t_ref[...], alpha=alpha, gamma=gamma)


def focal_loss(logits, targets, *, alpha=1.0, gamma=2.0, reduce=True, tile_n=None):
    """Pallas equivalent of FocalLoss.forward with scalar alpha.

    logits: (N, C) float (f32 or bf16), targets: (N,) int.
    """
    N, C = logits.shape
    itemsize = jnp.dtype(logits.dtype).itemsize
    c_pad = _round_up(C, 128)
    budget, limit_cap = _vmem_caps()

    if tile_n is None:
        tile_n = _choose_tile_n(c_pad, itemsize, budget)
    else:
        tile_n = max(8, _round_up(int(tile_n), 8))
    if tile_n >= N:
        tile_n = N                       # single full-extent block (always legal)
    num_tiles = -(-N // tile_n)

    t2 = targets.astype(jnp.int32).reshape(N, 1)

    in_specs = [
        pl.BlockSpec((tile_n, C), lambda i: (i, 0)),   # native dtype, no wrapper astype
        pl.BlockSpec((tile_n, 1), lambda i: (i, 0)),
    ]
    vmem_est = tile_n * _vmem_per_row(c_pad, itemsize) + (4 << 20)   # + slack
    vmem_limit = int(min(limit_cap, max(16 << 20, vmem_est)))
    compiler_params = pltpu.CompilerParams(
        dimension_semantics=("parallel",),             # no cross-iteration state
        vmem_limit_bytes=vmem_limit)

    if reduce:
        kernel = functools.partial(_focal_mean_kernel, alpha=float(alpha),
                                   gamma=float(gamma), n_valid=N, tile_n=tile_n)
        psums = pl.pallas_call(
            kernel,
            out_shape=jax.ShapeDtypeStruct((num_tiles, 1), jnp.float32),
            grid_spec=pltpu.PrefetchScalarGridSpec(
                num_scalar_prefetch=0,
                grid=(num_tiles,),
                in_specs=in_specs,
                out_specs=pl.BlockSpec((1, 1), lambda i: (i, 0),
                                       memory_space=pltpu.SMEM),
            ),
            compiler_params=compiler_params,
        )(logits, t2)
        return jnp.sum(psums) / jnp.float32(N)         # final pairwise reduce in JAX

    kernel = functools.partial(_focal_rows_kernel, alpha=float(alpha),
                               gamma=float(gamma))
    per_row = pl.pallas_call(
        kernel,
        out_shape=jax.ShapeDtypeStruct((N, 1), jnp.float32),
        grid_spec=pltpu.PrefetchScalarGridSpec(
            num_scalar_prefetch=0,
            grid=(num_tiles,),
            in_specs=in_specs,
            out_specs=pl.BlockSpec((tile_n, 1), lambda i: (i, 0)),
        ),
        compiler_params=compiler_params,
    )(logits, t2)
    return per_row[:, 0]


def _reference_focal_loss(logits, targets, alpha=1.0, gamma=2.0, reduce=True):
    logits = logits.astype(jnp.float32)
    lse = jax.nn.logsumexp(logits, axis=-1)
    ce = lse - jnp.take_along_axis(logits, targets[:, None], axis=-1)[:, 0]
    pt = jnp.exp(-ce)
    fl = alpha * (1.0 - pt) ** gamma * ce
    return fl.mean() if reduce else fl


if __name__ == "__main__":
    key = jax.random.PRNGKey(0)
    k1, k2, k3, k4 = jax.random.split(key, 4)

    # Case 1: small single tile (N=16, C=32), mean reduction (module default).
    N1, C1 = 16, 32
    logits1 = jax.random.normal(k1, (N1, C1), dtype=jnp.float32)
    targets1 = jax.random.randint(k2, (N1,), 0, C1, dtype=jnp.int32)
    out1 = jax.block_until_ready(focal_loss(logits1, targets1, alpha=1.0, gamma=2.0))
    ref1 = _reference_focal_loss(logits1, targets1)
    assert jnp.allclose(out1, ref1, atol=1e-5, rtol=1e-5), (out1, ref1)

    # Case 1b: bf16 inputs streamed natively (upcast happens inside the kernel).
    logits1_bf16 = logits1.astype(jnp.bfloat16)
    out1b = jax.block_until_ready(focal_loss(logits1_bf16, targets1))
    ref1b = _reference_focal_loss(logits1_bf16, targets1)
    assert jnp.allclose(out1b, ref1b, atol=1e-4, rtol=1e-4), (out1b, ref1b)

    # Case 2: multi-tile with a ragged boundary block (N=200, tile_n=64 -> 4
    # tiles, last tile only 8 valid rows), both mean and per-row paths.
    N2, C2 = 200, 40
    logits2 = jax.random.normal(k3, (N2, C2), dtype=jnp.float32)
    targets2 = jax.random.randint(k4, (N2,), 0, C2, dtype=jnp.int32)
    out2m = jax.block_until_ready(
        focal_loss(logits2, targets2, tile_n=64, reduce=True))
    out2r = jax.block_until_ready(
        focal_loss(logits2, targets2, tile_n=64, reduce=False))
    ref2m = _reference_focal_loss(logits2, targets2, reduce=True)
    ref2r = _reference_focal_loss(logits2, targets2, reduce=False)
    assert jnp.allclose(out2m, ref2m, atol=1e-5, rtol=1e-5), (out2m, ref2m)
    assert jnp.allclose(out2r, ref2r, atol=1e-5, rtol=1e-5)

    # Case 3: auto tile size (VMEM-budgeted; clamps to a single (N, C) block
    # here), mean and per-row paths.
    out3m = jax.block_until_ready(focal_loss(logits2, targets2, reduce=True))
    out3r = jax.block_until_ready(focal_loss(logits2, targets2, reduce=False))
    assert jnp.allclose(out3m, ref2m, atol=1e-5, rtol=1e-5), (out3m, ref2m)
    assert jnp.allclose(out3r, ref2r, atol=1e-5, rtol=1e-5)

    print("KERNEL_OK")
</pallas_src>

<mosaic_0001>
module attributes {stable_mosaic.version = 11 : i64} {
  func.func @_focal_mean_kernel(%arg0: i32, %arg1: memref<16x32xf32, #tpu.memory_space<vmem>>, %arg2: memref<16x1xi32, #tpu.memory_space<vmem>>, %arg3: memref<1x1xf32, #tpu.memory_space<smem>>) attributes {dimension_semantics = [#tpu.dimension_semantics<parallel>], iteration_bounds = array<i64: 1>, scalar_prefetch = 0 : i64, scratch_operands = 0 : i64, tpu.core_type = #tpu.core_type<tc>, window_params = [{transform_indices = @transform_0, window_bounds = array<i64: 16, 32>}, {transform_indices = @transform_1, window_bounds = array<i64: 16, 1>}, {transform_indices = @transform_2, window_bounds = array<i64: 1, 1>}]} {
    %c0 = arith.constant 0 : index
    %c0_0 = arith.constant 0 : index
    %0 = vector.load %arg1[%c0, %c0_0] : memref<16x32xf32, #tpu.memory_space<vmem>>, vector<16x32xf32>
    %c0_1 = arith.constant 0 : index
    %c0_2 = arith.constant 0 : index
    %1 = vector.load %arg2[%c0_1, %c0_2] : memref<16x1xi32, #tpu.memory_space<vmem>>, vector<16x1xi32>
    %cst = arith.constant dense<0xFF800000> : vector<16xf32>
    %2 = vector.multi_reduction <maximumf>, %0, %cst [1] : vector<16x32xf32> to vector<16xf32>
    %3 = vector.shape_cast %2 : vector<16xf32> to vector<16x1xf32>
    %4 = vector.broadcast %3 : vector<16x1xf32> to vector<16x32xf32>
    %5 = arith.subf %0, %4 : vector<16x32xf32>
    %6 = math.exp %5 : vector<16x32xf32>
    %cst_3 = arith.constant dense<0.000000e+00> : vector<16xf32>
    %7 = vector.multi_reduction <add>, %6, %cst_3 [1] : vector<16x32xf32> to vector<16xf32>
    %8 = vector.shape_cast %7 : vector<16xf32> to vector<16x1xf32>
    %9 = math.log %8 : vector<16x1xf32>
    %10 = arith.addf %3, %9 : vector<16x1xf32>
    %11 = tpu.iota {dimensions = array<i32: 1>} : vector<16x32xi32>
    %12 = vector.broadcast %1 : vector<16x1xi32> to vector<16x32xi32>
    %13 = arith.cmpi eq, %11, %12 : vector<16x32xi32>
    %cst_4 = arith.constant 0.000000e+00 : f32
    %14 = vector.broadcast %cst_4 : f32 to vector<16x32xf32>
    %15 = arith.select %13, %0, %14 : vector<16x32xi1>, vector<16x32xf32>
    %cst_5 = arith.constant dense<0.000000e+00> : vector<16xf32>
    %16 = vector.multi_reduction <add>, %15, %cst_5 [1] : vector<16x32xf32> to vector<16xf32>
    %17 = vector.shape_cast %16 : vector<16xf32> to vector<16x1xf32>
    %18 = arith.subf %10, %17 : vector<16x1xf32>
    %cst_6 = arith.constant 0.000000e+00 : f32
    %19 = vector.broadcast %cst_6 : f32 to vector<16x1xf32>
    %20 = arith.maximumf %18, %19 : vector<16x1xf32>
    %cst_7 = arith.constant 0.000000e+00 : f32
    %21 = vector.broadcast %cst_7 : f32 to vector<16x1xf32>
    %22 = arith.subf %21, %20 : vector<16x1xf32>
    %23 = math.exp %22 : vector<16x1xf32>
    %cst_8 = arith.constant 1.000000e+00 : f32
    %24 = vector.broadcast %cst_8 : f32 to vector<16x1xf32>
    %25 = arith.subf %24, %23 : vector<16x1xf32>
    %cst_9 = arith.constant 0.000000e+00 : f32
    %26 = vector.broadcast %cst_9 : f32 to vector<16x1xf32>
    %27 = arith.maximumf %25, %26 : vector<16x1xf32>
    %cst_10 = arith.constant 1.000000e+00 : f32
    %28 = vector.broadcast %cst_10 : f32 to vector<16x1xf32>
    %29 = arith.mulf %28, %27 : vector<16x1xf32>
    %30 = arith.mulf %29, %27 : vector<16x1xf32>
    %cst_11 = arith.constant 1.000000e+00 : f32
    %31 = vector.broadcast %cst_11 : f32 to vector<16x1xf32>
    %32 = arith.mulf %31, %30 : vector<16x1xf32>
    %33 = arith.mulf %32, %20 : vector<16x1xf32>
    %34 = tpu.iota {dimensions = array<i32: 0>} : vector<16x1xi32>
    %c16_i32 = arith.constant 16 : i32
    %35 = arith.muli %arg0, %c16_i32 : i32
    %36 = vector.broadcast %35 : i32 to vector<16x1xi32>
    %37 = arith.addi %34, %36 : vector<16x1xi32>
    %c16_i32_12 = arith.constant 16 : i32
    %38 = vector.broadcast %c16_i32_12 : i32 to vector<16x1xi32>
    %39 = arith.cmpi slt, %37, %38 : vector<16x1xi32>
    %cst_13 = arith.constant 0.000000e+00 : f32
    %40 = vector.broadcast %cst_13 : f32 to vector<16x1xf32>
    %41 = arith.select %39, %33, %40 : vector<16x1xi1>, vector<16x1xf32>
    %42 = vector.shape_cast %41 : vector<16x1xf32> to vector<1x16x1xf32>
    %cst_14 = arith.constant dense<0.000000e+00> : vector<1xf32>
    %43 = vector.multi_reduction <add>, %42, %cst_14 [1, 2] : vector<1x16x1xf32> to vector<1xf32>
    %44 = vector.shape_cast %43 : vector<1xf32> to vector<1x1x1xf32>
    %45 = vector.extract %44[0, 0, 0] : f32 from vector<1x1x1xf32>
    %c0_15 = arith.constant 0 : index
    %c0_16 = arith.constant 0 : index
    %46 = memref.load %arg3[%c0_15, %c0_16] : memref<1x1xf32, #tpu.memory_space<smem>>
    memref.store %45, %arg3[%c0_15, %c0_16] : memref<1x1xf32, #tpu.memory_space<smem>>
    return
  }
  func.func @transform_0(%arg0: i32) -> (i32, i32) {
    %c0_i32 = arith.constant 0 : i32
    %c0_i32_0 = arith.constant 0 : i32
    return %arg0, %c0_i32 : i32, i32
  }
  func.func @transform_1(%arg0: i32) -> (i32, i32) {
    %c0_i32 = arith.constant 0 : i32
    %c0_i32_0 = arith.constant 0 : i32
    return %arg0, %c0_i32 : i32, i32
  }
  func.func @transform_2(%arg0: i32) -> (i32, i32) {
    %c0_i32 = arith.constant 0 : i32
    %c0_i32_0 = arith.constant 0 : i32
    return %arg0, %c0_i32 : i32, i32
  }
}

</mosaic_0001>

<llo_original>
// kernel: tpu_custom_call.1
$region0: #{tpu_custom_call.1}
  #allocation0 [shape = 'u32[]', space=smem, size = 0x4, offset = 0x4, fixed_abs, tag = 'smem constant byte address 0x4 - core index']
  #allocation1 [shape = 'u32[72,128]{1,0:T(1,128)}', space=vmem, size = 0x9000, scoped, tag = 'internal scratch']
  %s0 = inlined_call_operand.vmem [shape: f32[16,32], index: 0, kind: input, shape index: {}]
  %s1 = inlined_call_operand.vmem [shape: s32[16,1], index: 1, kind: input, shape index: {}]
  %s2 = inlined_call_operand.hbm [shape: f32[1,1], index: 2, kind: output, shape index: {}]
  %s3 = sld [smem:[#allocation0]]
  $region18: #{tpu_custom_call.1} parent=0
    _
  %s5 = ssub.s32 1, %s3
  %s6 = scalar_select 0, %s5, %s3
  $region1: #{tpu_custom_call.1} parent=0
    #allocation2 [shape = 'u8[512]{0}', space=smem, size = 0x200, scoped, tag = 'output window, operand 0, single buffered']
    #allocation3 [shape = 's32[1]{0}', space=sflag, size = 0x4, scoped, tag = 'scoped memory for tpu_custom_call.1']
    %7 = vsyncpa [#allocation3], 0
    // Predicated region
    $region2: #{tpu_custom_call.1} parent=1 // pred_check
      _
    $region3: #{tpu_custom_call.1} parent=1 // pred_check_branch
      %9 = sbr.rel (0) target = $region5
    $region4: #{tpu_custom_call.1} parent=1 // pred_region
      _
    $region5: #{tpu_custom_call.1} parent=1 // pred_fallthru
      _
    // Predicated region
    $region6: #{tpu_custom_call.1} parent=1 // pred_check
      _
    $region7: #{tpu_custom_call.1} parent=1 // pred_check_branch
      %11 = sbr.rel (0) target = $region9
    $region8: #{tpu_custom_call.1} parent=1 // pred_region
      _
    $region9: #{tpu_custom_call.1} parent=1 // pred_fallthru
      _
    %v12 = vld [vmem:[%s0] sm:$0xff]
    %v13 = vld [vmem:[%s0 + $0x8] sm:$0xff]
    %v14 = vld [vmem:[%s1] sm:$0xff]
    %v15 = vld [vmem:[%s1 + $0x8] sm:$0xff]
    %vm16 = vcmask 261120
    %v17 = vsel %vm16, %v12, -inf
    %18 = vmax.xlane.f32.xlu0 %v17
    %v19 = vpop.xlane.xlu0 %18
    %v20 = vsel %vm16, %v13, -inf
    %21 = vmax.xlane.f32.xlu0 %v20
    %v22 = vpop.xlane.xlu0 %21
    %v23 = vsub.f32 %v12, %v19
    %v24 = vsub.f32 %v13, %v22
    %v25 = vmul.f32 %v23, 1.442695
    %v26 = vpow.pop %v25
    %v27 = vmul.f32 %v24, 1.442695
    %v28 = vpow.pop %v27
    %v29 = vsel %vm16, %v26, 0.0
    %30 = vadd.xlane.f32.xlu0 %v29
    %v31 = vpop.xlane.xlu0 %30
    %v32 = vsel %vm16, %v28, 0.0
    %33 = vadd.xlane.f32.xlu0 %v32
    %v34 = vpop.xlane.xlu0 %33
    %v35 = vlog2.pop %v31
    %v36 = vmul.f32 %v35, 0.6931472
    %v37 = vlog2.pop %v34
    %v38 = vmul.f32 %v37, 0.6931472
    %v39 = vadd.f32 %v19, %v36
    %v40 = vadd.f32 %v22, %v38
    %v41 = vlaneseq
    %v42 = vand.u32 %v41, 127
    %43 = vset.pattern.permute.xlu0 0
    %44 = vperm.xlu0 %43, %v14
    %v45 = vpop.permute.xlu0 %44
    %46 = vset.pattern.permute.xlu0 0
    %47 = vperm.xlu0 %46, %v15
    %v48 = vpop.permute.xlu0 %47
    %vm49 = vcmp.eq.s32.totalorder %v42, %v45
    %vm50 = vcmp.eq.s32.totalorder %v42, %v48
    %v51 = vsel %vm49, %v12, 0.0
    %v52 = vsel %vm50, %v13, 0.0
    %v53 = vsel %vm16, %v51, 0.0
    %54 = vadd.xlane.f32.xlu0 %v53
    %v55 = vpop.xlane.xlu0 %54
    %v56 = vsel %vm16, %v52, 0.0
    %57 = vadd.xlane.f32.xlu0 %v56
    %v58 = vpop.xlane.xlu0 %57
    %v59 = vsub.f32 %v39, %v55
    %v60 = vsub.f32 %v40, %v58
    %v61 = vmax.f32 %v59, 0.0
    %v62 = vmax.f32 %v60, 0.0
    %v63 = vsub.f32 0.0, %v61
    %v64 = vsub.f32 0.0, %v62
    %v65 = vmul.f32 %v63, 1.442695
    %v66 = vpow.pop %v65
    %v67 = vmul.f32 %v64, 1.442695
    %v68 = vpow.pop %v67
    %v69 = vsub.f32 1.0, %v66
    %v70 = vsub.f32 1.0, %v68
    %v71 = vmax.f32 %v69, 0.0
    %v72 = vmax.f32 %v70, 0.0
    %v73 = vmul.f32 %v71, %v71
    %v74 = vmul.f32 %v72, %v72
    %v75 = vmul.f32 %v73, %v61
    %v76 = vmul.f32 %v74, %v62
    %v77 = vlaneseq
    %v78 = vshrl.u32 %v77, 7
    %v79 = vadd.s32 %v78, 8
    %s80 = smul.u32 0, 16
    %v81 = vstv %s80
    %v82 = vadd.s32 %v78, %v81
    %v83 = vadd.s32 %v79, %v81
    %vm84 = vcmp.lt.s32.totalorder %v82, 16
    %vm85 = vcmp.lt.s32.totalorder %v83, 16
    %v86 = vsel %vm84, %v75, 0.0
    %v87 = vsel %vm85, %v76, 0.0
    %vm88 = vcmask 7168
    %v89 = vsel %vm88, %v86, 0.0
    %v90 = vsel %vm88, %v87, 0.0
    %v91 = vadd.f32 %v89, %v90
    %92 = vadd.xlane.f32.xlu0 %v91
    %v93 = vpop.xlane.xlu0 %92
    %v94 = vrot.slane %v93, 4
    %v95 = vadd.f32 %v93, %v94
    %v96 = vrot.slane %v95, 2
    %v97 = vadd.f32 %v95, %v96
    %v98 = vrot.slane %v97, 1
    %v99 = vadd.f32 %v97, %v98
    %s100 = vtos %v99
    %s101 = scalar_lea.smem [#allocation2], 0
    %102 = sst [smem:[%s101]] %s100
    // Predicated region
    $region10: #{tpu_custom_call.1} parent=1 // pred_check
      _
    $region11: #{tpu_custom_call.1} parent=1 // pred_check_branch
      %104 = sbr.rel (0) target = $region13
    $region12: #{tpu_custom_call.1} parent=1 // pred_region
      %106 = vsyncadd [#allocation3], 0
      %s108 = sshll.u32 %s2, 4
      %s109 = int_to_ptr.hbm [resolvable:$true] %s108
      %111 = dma.smem_to_hbm [#allocation2], 16, %s109, [#allocation3]
    $region13: #{tpu_custom_call.1} parent=1 // pred_fallthru
      _
    // Predicated region
    $region14: #{tpu_custom_call.1} parent=1 // pred_check
      _
    $region15: #{tpu_custom_call.1} parent=1 // pred_check_branch
      %113 = sbr.rel (0) target = $region17
    $region16: #{tpu_custom_call.1} parent=1 // pred_region
      %115 = dma.done [#allocation3], 16
    $region17: #{tpu_custom_call.1} parent=1 // pred_fallthru
      _
    %116 = sfence
    %117 = vsyncpa [#allocation3], 1

</llo_original>
